<compile_context>
chip_gen: v6e
topology: v6e:2x2x1
jax: 0.10.0
libtpu: 0.0.40
codegen_flags: <defaults>
</compile_context>

<pallas_src>
import functools
import math

import jax
import jax.numpy as jnp
from jax import lax
from jax.experimental import pallas as pl
from jax.experimental.pallas import tpu as pltpu

LN_EPS = 1e-5
_LANE = 128                                # lane width: pad embed_dim to this
_TARGET_ROWS = 2048                        # rows (tile_b*tile_s) per grid step
_VMEM_BUDGET_BYTES = 36 * 1024 * 1024      # v7x-safe working-set budget
_VMEM_LIMIT_BYTES = 48 * 1024 * 1024       # scoped VMEM limit (<= v7x 64 MiB physical)


def _round_up(x, m):
    return (x + m - 1) // m * m


# ---------------------------------------------------------------------------
# Kernels
# ---------------------------------------------------------------------------

def _layernorm(emb, gamma, beta, n_valid):
    """Two-pass LayerNorm over the last dim.

    `n_valid` real features; columns >= n_valid are guaranteed zero (weight /
    bias / table pad columns are zero), so the mean sum is already correct and
    only the variance needs a mask.
    """
    e_pad = emb.shape[-1]
    inv_n = 1.0 / n_valid
    mean = jnp.sum(emb, axis=-1, keepdims=True) * inv_n
    centered = emb - mean
    if n_valid != e_pad:
        col = lax.broadcasted_iota(jnp.int32, emb.shape, emb.ndim - 1)
        centered = jnp.where(col < n_valid, centered, 0.0)
    var = jnp.sum(centered * centered, axis=-1, keepdims=True) * inv_n
    norm = centered * lax.rsqrt(var + LN_EPS)
    return norm * gamma + beta


def _embed_kernel(states_ref, actions_ref, w_ref, b_ref, tab_ref,
                  gamma_ref, beta_ref, pos_ref, out_ref, *, n_valid):
    # states_ref : (tile_b, tile_s, state_dim)  stream dtype
    # actions_ref: (tile_b, tile_s, 1)          int32
    # w_ref      : (state_dim, E_pad) f32 ; b/gamma/beta: (1, E_pad) f32
    # tab_ref    : (A, E_pad) f32
    # pos_ref    : (tile_s, E_pad)              stream dtype
    # out_ref    : (tile_b, tile_s, E_pad)      stream dtype
    tb, ts, sd = states_ref.shape
    e_pad = out_ref.shape[-1]
    rows = tb * ts

    # State projection on the MXU (compute in f32 regardless of stream dtype).
    x = states_ref[...].astype(jnp.float32).reshape(rows, sd)
    emb = jnp.dot(x, w_ref[...], preferred_element_type=jnp.float32)

    # Action gather as one-hot @ table on the MXU (no VALU select loop).
    acts = actions_ref[...].reshape(rows, 1)
    n_actions = tab_ref.shape[0]
    col = lax.broadcasted_iota(jnp.int32, (rows, n_actions), 1)
    onehot = (col == acts).astype(jnp.float32)
    emb = emb + jnp.dot(onehot, tab_ref[...], preferred_element_type=jnp.float32)

    emb = emb + b_ref[...]
    y = _layernorm(emb, gamma_ref[...], beta_ref[...], n_valid)
    y = y.reshape(tb, ts, e_pad) + pos_ref[...].astype(jnp.float32)
    out_ref[...] = y.astype(out_ref.dtype)


def _embed_kernel_no_actions(states_ref, w_ref, b_ref,
                             gamma_ref, beta_ref, pos_ref, out_ref, *, n_valid):
    tb, ts, sd = states_ref.shape
    e_pad = out_ref.shape[-1]
    rows = tb * ts

    x = states_ref[...].astype(jnp.float32).reshape(rows, sd)
    emb = jnp.dot(x, w_ref[...], preferred_element_type=jnp.float32) + b_ref[...]
    y = _layernorm(emb, gamma_ref[...], beta_ref[...], n_valid)
    y = y.reshape(tb, ts, e_pad) + pos_ref[...].astype(jnp.float32)
    out_ref[...] = y.astype(out_ref.dtype)


# ---------------------------------------------------------------------------
# Wrapper
# ---------------------------------------------------------------------------

def _choose_tiles(B, S, target_rows):
    """Pick (tile_b, tile_s) with tile_b*tile_s ~= target_rows."""
    if S % 8 != 0:
        # Keep tile_s == S (full-dim blocks are always legal) and avoid an
        # unaligned sublane collapse in the in-kernel reshape.
        return 1, S
    if S >= target_rows:
        return 1, max(8, (target_rows // 8) * 8)
    tile_s = S
    tile_b = max(1, min(B, target_rows // S))
    # v7x megacore: keep >= 2 grid steps when there is enough work for 2 TCs.
    if tile_b == B and B > 1 and B * S >= 2048:
        tile_b = pl.cdiv(B, 2)
    return tile_b, tile_s


def _vmem_estimate(tile_b, tile_s, state_dim, e_pad, n_actions, stream_bytes):
    rows = tile_b * tile_s
    per_step = (rows * state_dim * stream_bytes      # states tile
                + rows * 4                           # actions tile
                + tile_s * e_pad * stream_bytes      # pos tile
                + rows * e_pad * stream_bytes)       # out tile
    weights = (state_dim + n_actions + 3) * e_pad * 4
    intermediates = 4 * rows * e_pad * 4             # f32 working set in kernel
    return 2 * (per_step + weights) + intermediates  # x2 for double buffering


def state_action_embedding(states, actions, params, *, stream_dtype=jnp.float32):
    """states: (B, S, state_dim); actions: (B, S) int or None -> (B, S, E)."""
    B, S, state_dim = states.shape
    E = params["w_state"].shape[1]
    n_actions = params["emb_table"].shape[0]
    e_pad = _round_up(E, _LANE)
    pad = e_pad - E
    stream_bytes = jnp.dtype(stream_dtype).itemsize

    def pad_cols(a):
        if pad == 0:
            return a
        widths = [(0, 0)] * (a.ndim - 1) + [(0, pad)]
        return jnp.pad(a, widths)

    # Small resident operands stay f32; streamed operands use stream_dtype.
    w = pad_cols(params["w_state"]).astype(jnp.float32)
    tab = pad_cols(params["emb_table"]).astype(jnp.float32)
    b = pad_cols(params["b_state"].reshape(1, E)).astype(jnp.float32)
    gamma = pad_cols(params["ln_gamma"].reshape(1, E)).astype(jnp.float32)
    beta = pad_cols(params["ln_beta"].reshape(1, E)).astype(jnp.float32)
    pos = pad_cols(params["pos_emb"][:S]).astype(stream_dtype)     # (S, E_pad)
    states_in = states.astype(stream_dtype)

    # Tile selection under a v7x-safe VMEM budget.
    target = _TARGET_ROWS
    while True:
        tile_b, tile_s = _choose_tiles(B, S, target)
        est = _vmem_estimate(tile_b, tile_s, state_dim, e_pad, n_actions,
                             stream_bytes)
        if est <= _VMEM_BUDGET_BYTES or target <= 256:
            break
        target //= 2

    n_s_tiles = pl.cdiv(S, tile_s)
    n_b_tiles = pl.cdiv(B, tile_b)
    # Grid: seq tiles outer, batch tiles inner -> the pos tile index is
    # unchanged across consecutive batch steps (no re-DMA of pos per batch).
    grid = (n_s_tiles, n_b_tiles)

    def fixed2d(arr):
        return pl.BlockSpec(arr.shape, lambda s, bi: (0, 0))

    state_spec = pl.BlockSpec((tile_b, tile_s, state_dim), lambda s, bi: (bi, s, 0))
    pos_spec = pl.BlockSpec((tile_s, e_pad), lambda s, bi: (s, 0))
    out_spec = pl.BlockSpec((tile_b, tile_s, e_pad), lambda s, bi: (bi, s, 0))

    out_shape = jax.ShapeDtypeStruct((B, S, e_pad), stream_dtype)
    compiler_params = pltpu.CompilerParams(
        dimension_semantics=("parallel", "parallel"),
        vmem_limit_bytes=_VMEM_LIMIT_BYTES,
    )

    has_actions = actions is not None
    mm_flops = 2 * B * S * e_pad * (state_dim + (n_actions if has_actions else 0))
    cost = pl.CostEstimate(
        flops=int(mm_flops + 8 * B * S * e_pad),
        transcendentals=int(B * S),
        bytes_accessed=int(B * S * state_dim * stream_bytes
                           + (B * S * 4 if has_actions else 0)
                           + S * e_pad * stream_bytes
                           + B * S * e_pad * stream_bytes
                           + (state_dim + n_actions + 3) * e_pad * 4),
    )

    if has_actions:
        actions3 = actions.reshape(B, S, 1).astype(jnp.int32)
        act_spec = pl.BlockSpec((tile_b, tile_s, 1), lambda s, bi: (bi, s, 0))
        kernel = functools.partial(_embed_kernel, n_valid=E)
        out = pl.pallas_call(
            kernel,
            out_shape=out_shape,
            grid=grid,
            in_specs=[state_spec, act_spec,
                      fixed2d(w), fixed2d(b), fixed2d(tab),
                      fixed2d(gamma), fixed2d(beta), pos_spec],
            out_specs=out_spec,
            compiler_params=compiler_params,
            cost_estimate=cost,
        )(states_in, actions3, w, b, tab, gamma, beta, pos)
    else:
        kernel = functools.partial(_embed_kernel_no_actions, n_valid=E)
        out = pl.pallas_call(
            kernel,
            out_shape=out_shape,
            grid=grid,
            in_specs=[state_spec,
                      fixed2d(w), fixed2d(b),
                      fixed2d(gamma), fixed2d(beta), pos_spec],
            out_specs=out_spec,
            compiler_params=compiler_params,
            cost_estimate=cost,
        )(states_in, w, b, gamma, beta, pos)

    return out if pad == 0 else out[..., :E]


# ---------------------------------------------------------------------------
# Parameter init (mirrors the torch module) + pure-JAX reference
# ---------------------------------------------------------------------------

def make_params(key, state_dim, action_dim, embed_dim, max_seq_len):
    k1, k2, k3 = jax.random.split(key, 3)
    # nn.Linear(state_dim, embed_dim): uniform(-1/sqrt(in), 1/sqrt(in))
    bound = 1.0 / math.sqrt(state_dim)
    w_state = jax.random.uniform(k1, (state_dim, embed_dim), jnp.float32,
                                 -bound, bound)
    b_state = jax.random.uniform(k2, (embed_dim,), jnp.float32, -bound, bound)
    # nn.Embedding(action_dim, embed_dim): normal(0, 1)
    emb_table = jax.random.normal(k3, (action_dim, embed_dim), jnp.float32)
    # nn.LayerNorm(embed_dim)
    ln_gamma = jnp.ones((embed_dim,), jnp.float32)
    ln_beta = jnp.zeros((embed_dim,), jnp.float32)
    # PositionalEncoding: sine-cosine init of the learnable table.
    position = jnp.arange(max_seq_len, dtype=jnp.float32)[:, None]
    div_term = jnp.exp(jnp.arange(0, embed_dim, 2, dtype=jnp.float32)
                       * (-math.log(10000.0) / embed_dim))
    pos = jnp.zeros((max_seq_len, embed_dim), jnp.float32)
    pos = pos.at[:, 0::2].set(jnp.sin(position * div_term))
    pos = pos.at[:, 1::2].set(jnp.cos(position * div_term[: embed_dim // 2]))
    return {
        "w_state": w_state, "b_state": b_state,
        "emb_table": emb_table,
        "ln_gamma": ln_gamma, "ln_beta": ln_beta,
        "pos_emb": pos,
    }


def reference(states, actions, params):
    x = states @ params["w_state"] + params["b_state"]
    emb = x if actions is None else x + params["emb_table"][actions]
    mean = emb.mean(-1, keepdims=True)
    var = ((emb - mean) ** 2).mean(-1, keepdims=True)
    norm = (emb - mean) / jnp.sqrt(var + LN_EPS)
    y = norm * params["ln_gamma"] + params["ln_beta"]
    S = states.shape[1]
    return y + params["pos_emb"][None, :S, :]


if __name__ == "__main__":
    key = jax.random.PRNGKey(0)

    # --- Case 1: small shapes (embed_dim < 128 exercises the lane-pad path) ---
    B, S = 2, 8
    state_dim, action_dim, embed_dim, max_seq_len = 16, 4, 32, 16
    kp, ks, ka = jax.random.split(key, 3)
    params = make_params(kp, state_dim, action_dim, embed_dim, max_seq_len)
    states = jax.random.normal(ks, (B, S, state_dim), jnp.float32)
    actions = jax.random.randint(ka, (B, S), 0, action_dim, jnp.int32)

    out = jax.block_until_ready(state_action_embedding(states, actions, params))
    ref = reference(states, actions, params)
    assert out.shape == (B, S, embed_dim)
    assert jnp.allclose(out, ref, atol=1e-4, rtol=1e-4), "mismatch (actions, f32)"

    out_no_a = jax.block_until_ready(state_action_embedding(states, None, params))
    ref_no_a = reference(states, None, params)
    assert jnp.allclose(out_no_a, ref_no_a, atol=1e-4, rtol=1e-4), \
        "mismatch (actions=None, f32)"

    # --- Case 2: bf16 streaming (halved HBM traffic), f32 math inside ---
    out_bf = jax.block_until_ready(
        state_action_embedding(states, actions, params, stream_dtype=jnp.bfloat16))
    assert out_bf.dtype == jnp.bfloat16
    params_r = dict(params)
    params_r["pos_emb"] = params["pos_emb"].astype(jnp.bfloat16).astype(jnp.float32)
    states_r = states.astype(jnp.bfloat16).astype(jnp.float32)
    ref_bf = reference(states_r, actions, params_r)
    assert jnp.allclose(out_bf.astype(jnp.float32), ref_bf, atol=5e-2, rtol=5e-2), \
        "mismatch (actions, bf16 streaming)"

    # --- Case 3: lane-aligned embed_dim (no padding) + batch-blocked tiles ---
    B2, S2 = 2, 16
    sd2, a2, e2, msl2 = 24, 6, 128, 32
    kp2, ks2, ka2 = jax.random.split(jax.random.PRNGKey(0), 3)
    params2 = make_params(kp2, sd2, a2, e2, msl2)
    states2 = jax.random.normal(ks2, (B2, S2, sd2), jnp.float32)
    actions2 = jax.random.randint(ka2, (B2, S2), 0, a2, jnp.int32)
    out2 = jax.block_until_ready(state_action_embedding(states2, actions2, params2))
    ref2 = reference(states2, actions2, params2)
    assert out2.shape == (B2, S2, e2)
    assert jnp.allclose(out2, ref2, atol=1e-4, rtol=1e-4), "mismatch (E=128, f32)"

    print("KERNEL_OK")
</pallas_src>

<mosaic_0001>
module attributes {stable_mosaic.version = 11 : i64} {
  func.func @_embed_kernel(%arg0: i32, %arg1: i32, %arg2: memref<2x8x16xf32, #tpu.memory_space<vmem>>, %arg3: memref<2x8x1xi32, #tpu.memory_space<vmem>>, %arg4: memref<16x128xf32, #tpu.memory_space<vmem>>, %arg5: memref<1x128xf32, #tpu.memory_space<vmem>>, %arg6: memref<4x128xf32, #tpu.memory_space<vmem>>, %arg7: memref<1x128xf32, #tpu.memory_space<vmem>>, %arg8: memref<1x128xf32, #tpu.memory_space<vmem>>, %arg9: memref<8x128xf32, #tpu.memory_space<vmem>>, %arg10: memref<2x8x128xf32, #tpu.memory_space<vmem>>) attributes {dimension_semantics = [#tpu.dimension_semantics<parallel>, #tpu.dimension_semantics<parallel>], iteration_bounds = array<i64: 1, 1>, scalar_prefetch = 0 : i64, scratch_operands = 0 : i64, tpu.core_type = #tpu.core_type<tc>, window_params = [{transform_indices = @transform_0, window_bounds = array<i64: 2, 8, 16>}, {transform_indices = @transform_1, window_bounds = array<i64: 2, 8, 1>}, {pipeline_mode = #tpu.pipeline_mode<synchronous>, transform_indices = @transform_2, window_bounds = array<i64: 16, 128>}, {pipeline_mode = #tpu.pipeline_mode<synchronous>, transform_indices = @transform_3, window_bounds = array<i64: 1, 128>}, {pipeline_mode = #tpu.pipeline_mode<synchronous>, transform_indices = @transform_4, window_bounds = array<i64: 4, 128>}, {pipeline_mode = #tpu.pipeline_mode<synchronous>, transform_indices = @transform_5, window_bounds = array<i64: 1, 128>}, {pipeline_mode = #tpu.pipeline_mode<synchronous>, transform_indices = @transform_6, window_bounds = array<i64: 1, 128>}, {transform_indices = @transform_7, window_bounds = array<i64: 8, 128>}, {transform_indices = @transform_8, window_bounds = array<i64: 2, 8, 128>}]} {
    %c0 = arith.constant 0 : index
    %c0_0 = arith.constant 0 : index
    %c0_1 = arith.constant 0 : index
    %0 = vector.load %arg2[%c0, %c0_0, %c0_1] : memref<2x8x16xf32, #tpu.memory_space<vmem>>, vector<2x8x16xf32>
    %1 = vector.shape_cast %0 : vector<2x8x16xf32> to vector<16x16xf32>
    %c0_2 = arith.constant 0 : index
    %c0_3 = arith.constant 0 : index
    %2 = vector.load %arg4[%c0_2, %c0_3] : memref<16x128xf32, #tpu.memory_space<vmem>>, vector<16x128xf32>
    %cst = arith.constant dense<0.000000e+00> : vector<16x128xf32>
    %3 = tpu.matmul %1, %2, %cst {dimension_numbers = #tpu.dot_dimension_numbers<[1], [0], [0], [1], [0, 0, 1, 1], [], []>} : vector<16x16xf32>, vector<16x128xf32>, vector<16x128xf32> -> vector<16x128xf32>
    %c0_4 = arith.constant 0 : index
    %c0_5 = arith.constant 0 : index
    %c0_6 = arith.constant 0 : index
    %4 = vector.load %arg3[%c0_4, %c0_5, %c0_6] : memref<2x8x1xi32, #tpu.memory_space<vmem>>, vector<2x8x1xi32>
    %5 = vector.shape_cast %4 : vector<2x8x1xi32> to vector<16x1xi32>
    %6 = tpu.iota {dimensions = array<i32: 1>} : vector<16x4xi32>
    %7 = vector.broadcast %5 : vector<16x1xi32> to vector<16x4xi32>
    %8 = arith.cmpi eq, %6, %7 : vector<16x4xi32>
    %9 = arith.extui %8 : vector<16x4xi1> to vector<16x4xi32>
    %10 = arith.sitofp %9 : vector<16x4xi32> to vector<16x4xf32>
    %c0_7 = arith.constant 0 : index
    %c0_8 = arith.constant 0 : index
    %11 = vector.load %arg6[%c0_7, %c0_8] : memref<4x128xf32, #tpu.memory_space<vmem>>, vector<4x128xf32>
    %cst_9 = arith.constant dense<0.000000e+00> : vector<16x128xf32>
    %12 = tpu.matmul %10, %11, %cst_9 {dimension_numbers = #tpu.dot_dimension_numbers<[1], [0], [0], [1], [0, 0, 1, 1], [], []>} : vector<16x4xf32>, vector<4x128xf32>, vector<16x128xf32> -> vector<16x128xf32>
    %13 = arith.addf %3, %12 : vector<16x128xf32>
    %c0_10 = arith.constant 0 : index
    %c0_11 = arith.constant 0 : index
    %14 = vector.load %arg5[%c0_10, %c0_11] : memref<1x128xf32, #tpu.memory_space<vmem>>, vector<1x128xf32>
    %15 = vector.broadcast %14 : vector<1x128xf32> to vector<16x128xf32>
    %16 = arith.addf %13, %15 : vector<16x128xf32>
    %c0_12 = arith.constant 0 : index
    %c0_13 = arith.constant 0 : index
    %17 = vector.load %arg7[%c0_12, %c0_13] : memref<1x128xf32, #tpu.memory_space<vmem>>, vector<1x128xf32>
    %c0_14 = arith.constant 0 : index
    %c0_15 = arith.constant 0 : index
    %18 = vector.load %arg8[%c0_14, %c0_15] : memref<1x128xf32, #tpu.memory_space<vmem>>, vector<1x128xf32>
    %cst_16 = arith.constant dense<0.000000e+00> : vector<16xf32>
    %19 = vector.multi_reduction <add>, %16, %cst_16 [1] : vector<16x128xf32> to vector<16xf32>
    %20 = vector.shape_cast %19 : vector<16xf32> to vector<16x1xf32>
    %cst_17 = arith.constant 3.125000e-02 : f32
    %21 = vector.broadcast %cst_17 : f32 to vector<16x1xf32>
    %22 = arith.mulf %20, %21 : vector<16x1xf32>
    %23 = vector.broadcast %22 : vector<16x1xf32> to vector<16x128xf32>
    %24 = arith.subf %16, %23 : vector<16x128xf32>
    %25 = tpu.iota {dimensions = array<i32: 1>} : vector<16x128xi32>
    %c32_i32 = arith.constant 32 : i32
    %26 = vector.broadcast %c32_i32 : i32 to vector<16x128xi32>
    %27 = arith.cmpi slt, %25, %26 : vector<16x128xi32>
    %cst_18 = arith.constant 0.000000e+00 : f32
    %28 = vector.broadcast %cst_18 : f32 to vector<16x128xf32>
    %29 = arith.select %27, %24, %28 : vector<16x128xi1>, vector<16x128xf32>
    %30 = arith.mulf %29, %29 : vector<16x128xf32>
    %cst_19 = arith.constant dense<0.000000e+00> : vector<16xf32>
    %31 = vector.multi_reduction <add>, %30, %cst_19 [1] : vector<16x128xf32> to vector<16xf32>
    %32 = vector.shape_cast %31 : vector<16xf32> to vector<16x1xf32>
    %cst_20 = arith.constant 3.125000e-02 : f32
    %33 = vector.broadcast %cst_20 : f32 to vector<16x1xf32>
    %34 = arith.mulf %32, %33 : vector<16x1xf32>
    %cst_21 = arith.constant 9.99999974E-6 : f32
    %35 = vector.broadcast %cst_21 : f32 to vector<16x1xf32>
    %36 = arith.addf %34, %35 : vector<16x1xf32>
    %37 = math.rsqrt %36 : vector<16x1xf32>
    %38 = vector.broadcast %37 : vector<16x1xf32> to vector<16x128xf32>
    %39 = arith.mulf %29, %38 : vector<16x128xf32>
    %40 = vector.broadcast %17 : vector<1x128xf32> to vector<16x128xf32>
    %41 = arith.mulf %39, %40 : vector<16x128xf32>
    %42 = vector.broadcast %18 : vector<1x128xf32> to vector<16x128xf32>
    %43 = arith.addf %41, %42 : vector<16x128xf32>
    %44 = vector.shape_cast %43 : vector<16x128xf32> to vector<2x8x128xf32>
    %c0_22 = arith.constant 0 : index
    %c0_23 = arith.constant 0 : index
    %45 = vector.load %arg9[%c0_22, %c0_23] : memref<8x128xf32, #tpu.memory_space<vmem>>, vector<8x128xf32>
    %46 = vector.shape_cast %45 : vector<8x128xf32> to vector<1x8x128xf32>
    %47 = vector.broadcast %46 : vector<1x8x128xf32> to vector<2x8x128xf32>
    %48 = arith.addf %44, %47 : vector<2x8x128xf32>
    %c0_24 = arith.constant 0 : index
    %c0_25 = arith.constant 0 : index
    %c0_26 = arith.constant 0 : index
    %49 = vector.load %arg10[%c0_24, %c0_25, %c0_26] : memref<2x8x128xf32, #tpu.memory_space<vmem>>, vector<2x8x128xf32>
    tpu.vector_store %arg10[%c0_24, %c0_25, %c0_26], %48 {strides = array<i32>} : memref<2x8x128xf32, #tpu.memory_space<vmem>>, vector<2x8x128xf32>,
    return
  }
  func.func @transform_0(%arg0: i32, %arg1: i32) -> (i32, i32, i32) {
    %c0_i32 = arith.constant 0 : i32
    %c0_i32_0 = arith.constant 0 : i32
    return %arg1, %arg0, %c0_i32 : i32, i32, i32
  }
  func.func @transform_1(%arg0: i32, %arg1: i32) -> (i32, i32, i32) {
    %c0_i32 = arith.constant 0 : i32
    %c0_i32_0 = arith.constant 0 : i32
    return %arg1, %arg0, %c0_i32 : i32, i32, i32
  }
  func.func @transform_2(%arg0: i32, %arg1: i32) -> (i32, i32) {
    %c0_i32 = arith.constant 0 : i32
    %c0_i32_0 = arith.constant 0 : i32
    %c0_i32_1 = arith.constant 0 : i32
    return %c0_i32, %c0_i32_0 : i32, i32
  }
  func.func @transform_3(%arg0: i32, %arg1: i32) -> (i32, i32) {
    %c0_i32 = arith.constant 0 : i32
    %c0_i32_0 = arith.constant 0 : i32
    %c0_i32_1 = arith.constant 0 : i32
    return %c0_i32, %c0_i32_0 : i32, i32
  }
  func.func @transform_4(%arg0: i32, %arg1: i32) -> (i32, i32) {
    %c0_i32 = arith.constant 0 : i32
    %c0_i32_0 = arith.constant 0 : i32
    %c0_i32_1 = arith.constant 0 : i32
    return %c0_i32, %c0_i32_0 : i32, i32
  }
  func.func @transform_5(%arg0: i32, %arg1: i32) -> (i32, i32) {
    %c0_i32 = arith.constant 0 : i32
    %c0_i32_0 = arith.constant 0 : i32
    %c0_i32_1 = arith.constant 0 : i32
    return %c0_i32, %c0_i32_0 : i32, i32
  }
  func.func @transform_6(%arg0: i32, %arg1: i32) -> (i32, i32) {
    %c0_i32 = arith.constant 0 : i32
    %c0_i32_0 = arith.constant 0 : i32
    %c0_i32_1 = arith.constant 0 : i32
    return %c0_i32, %c0_i32_0 : i32, i32
  }
  func.func @transform_7(%arg0: i32, %arg1: i32) -> (i32, i32) {
    %c0_i32 = arith.constant 0 : i32
    %c0_i32_0 = arith.constant 0 : i32
    return %arg0, %c0_i32 : i32, i32
  }
  func.func @transform_8(%arg0: i32, %arg1: i32) -> (i32, i32, i32) {
    %c0_i32 = arith.constant 0 : i32
    %c0_i32_0 = arith.constant 0 : i32
    return %arg1, %arg0, %c0_i32 : i32, i32, i32
  }
}

</mosaic_0001>

<llo_original>
// kernel: tpu_custom_call.1
$region0: #{tpu_custom_call.1}
  #allocation0 [shape = 'u32[]', space=smem, size = 0x4, offset = 0x4, fixed_abs, tag = 'smem constant byte address 0x4 - core index']
  #allocation1 [shape = 'u32[144,128]{1,0:T(1,128)}', space=vmem, size = 0x12000, scoped, tag = 'internal scratch']
  %s0 = inlined_call_operand.vmem [shape: f32[2,8,16], index: 0, kind: input, shape index: {}]
  %s1 = inlined_call_operand.vmem [shape: s32[2,8,1], index: 1, kind: input, shape index: {}]
  %s2 = inlined_call_operand.hbm [shape: f32[16,128], index: 2, kind: input, shape index: {}]
  %s3 = inlined_call_operand.vmem [shape: f32[1,128], index: 3, kind: input, shape index: {}]
  %s4 = inlined_call_operand.hbm [shape: f32[4,128], index: 4, kind: input, shape index: {}]
  %s5 = inlined_call_operand.vmem [shape: f32[1,128], index: 5, kind: input, shape index: {}]
  %s6 = inlined_call_operand.vmem [shape: f32[1,128], index: 6, kind: input, shape index: {}]
  %s7 = inlined_call_operand.vmem [shape: f32[8,128], index: 7, kind: input, shape index: {}]
  %s8 = inlined_call_operand.hbm [shape: f32[2,8,128], index: 8, kind: output, shape index: {}]
  %s9 = sld [smem:[#allocation0]]
  $region50: #{tpu_custom_call.1} parent=0
    _
  %s11 = ssub.s32 1, %s9
  %s12 = scalar_select 0, %s11, %s9
  $region1: #{tpu_custom_call.1} parent=0
    #allocation2 [shape = 'u8[8192]{0}', space=vmem, size = 0x2000, scoped, tag = 'input window, operand 2, single buffered']
    #allocation3 [shape = 's32[1]{0}', space=sflag, size = 0x4, scoped, tag = 'scoped memory for tpu_custom_call.1']
    #allocation4 [shape = 's32[1]{0}', space=sflag, size = 0x4, scoped, tag = 'scoped memory for tpu_custom_call.1']
    #allocation5 [shape = 'u8[2048]{0}', space=vmem, size = 0x800, scoped, tag = 'input window, operand 4, single buffered']
    #allocation6 [shape = 's32[1]{0}', space=sflag, size = 0x4, scoped, tag = 'scoped memory for tpu_custom_call.1']
    #allocation7 [shape = 'u8[8192]{0}', space=vmem, size = 0x2000, scoped, tag = 'output window, operand 0, single buffered']
    %13 = vsyncpa [#allocation3], 0
    %14 = vsyncpa [#allocation6], 0
    %15 = vsyncpa [#allocation4], 0
    // Predicated region
    $region2: #{tpu_custom_call.1} parent=1 // pred_check
      _
    $region3: #{tpu_custom_call.1} parent=1 // pred_check_branch
      %17 = sbr.rel (0) target = $region5
    $region4: #{tpu_custom_call.1} parent=1 // pred_region
      _
    $region5: #{tpu_custom_call.1} parent=1 // pred_fallthru
      _
    // Predicated region
    $region6: #{tpu_custom_call.1} parent=1 // pred_check
      _
    $region7: #{tpu_custom_call.1} parent=1 // pred_check_branch
      %19 = sbr.rel (0) target = $region9
    $region8: #{tpu_custom_call.1} parent=1 // pred_region
      _
    $region9: #{tpu_custom_call.1} parent=1 // pred_fallthru
      _
    // Predicated region
    $region10: #{tpu_custom_call.1} parent=1 // pred_check
      _
    $region11: #{tpu_custom_call.1} parent=1 // pred_check_branch
      %21 = sbr.rel (0) target = $region13
    $region12: #{tpu_custom_call.1} parent=1 // pred_region
      %s23 = ssub.s32 256, 256
      %24 = vsyncadd [#allocation3], %s23
      %s25 = sshll.u32 [#allocation2], 4
      %s26 = int_to_ptr.vmem [resolvable:$true] %s25
      %31 = dma.hbm_to_vmem [thread:$0]  %s2, 256, %s26, [#allocation3], 128, 128, 8
    $region13: #{tpu_custom_call.1} parent=1 // pred_fallthru
      _
    // Predicated region
    $region14: #{tpu_custom_call.1} parent=1 // pred_check
      _
    $region15: #{tpu_custom_call.1} parent=1 // pred_check_branch
      %33 = sbr.rel (0) target = $region17
    $region16: #{tpu_custom_call.1} parent=1 // pred_region
      _
    $region17: #{tpu_custom_call.1} parent=1 // pred_fallthru
      _
    // Predicated region
    $region18: #{tpu_custom_call.1} parent=1 // pred_check
      _
    $region19: #{tpu_custom_call.1} parent=1 // pred_check_branch
      %35 = sbr.rel (0) target = $region21
    $region20: #{tpu_custom_call.1} parent=1 // pred_region
      %s37 = ssub.s32 64, 64
      %38 = vsyncadd [#allocation6], %s37
      %s40 = sshll.u32 [#allocation5], 4
      %s41 = int_to_ptr.vmem [resolvable:$true] %s40
      %43 = dma.hbm_to_vmem [thread:$0]  %s4, 64, %s41, [#allocation6]
    $region21: #{tpu_custom_call.1} parent=1 // pred_fallthru
      _
    // Predicated region
    $region22: #{tpu_custom_call.1} parent=1 // pred_check
      _
    $region23: #{tpu_custom_call.1} parent=1 // pred_check_branch
      %45 = sbr.rel (0) target = $region25
    $region24: #{tpu_custom_call.1} parent=1 // pred_region
      _
    $region25: #{tpu_custom_call.1} parent=1 // pred_fallthru
      _
    // Predicated region
    $region26: #{tpu_custom_call.1} parent=1 // pred_check
      _
    $region27: #{tpu_custom_call.1} parent=1 // pred_check_branch
      %47 = sbr.rel (0) target = $region29
    $region28: #{tpu_custom_call.1} parent=1 // pred_region
      _
    $region29: #{tpu_custom_call.1} parent=1 // pred_fallthru
      _
    // Predicated region
    $region30: #{tpu_custom_call.1} parent=1 // pred_check
      _
    $region31: #{tpu_custom_call.1} parent=1 // pred_check_branch
      %49 = sbr.rel (0) target = $region33
    $region32: #{tpu_custom_call.1} parent=1 // pred_region
      _
    $region33: #{tpu_custom_call.1} parent=1 // pred_fallthru
      _
    // Predicated region
    $region34: #{tpu_custom_call.1} parent=1 // pred_check
      _
    $region35: #{tpu_custom_call.1} parent=1 // pred_check_branch
      %51 = sbr.rel (0) target = $region37
    $region36: #{tpu_custom_call.1} parent=1 // pred_region
      %52 = dma.done [#allocation3], 256
    $region37: #{tpu_custom_call.1} parent=1 // pred_fallthru
      _
    // Predicated region
    $region38: #{tpu_custom_call.1} parent=1 // pred_check
      _
    $region39: #{tpu_custom_call.1} parent=1 // pred_check_branch
      %54 = sbr.rel (0) target = $region41
    $region40: #{tpu_custom_call.1} parent=1 // pred_region
      %55 = dma.done [#allocation6], 64
    $region41: #{tpu_custom_call.1} parent=1 // pred_fallthru
      _
    %v56 = vld [vmem:[%s0] sm:$0xff]
    %v57 = vld [vmem:[%s0 + $0x8] sm:$0xff]
    %v58 = vld [vmem:[#allocation2] sm:$0xff]
    %v59 = vld [vmem:[#allocation2 + $0x8] sm:$0xff]
    %v60 = vld [vmem:[%s1] sm:$0xff]
    %v61 = vld [vmem:[%s1 + $0x8] sm:$0xff]
    %v62 = vlaneseq
    %v63 = vand.u32 %v62, 127
    %64 = vset.pattern.permute.xlu0 0
    %65 = vperm.xlu0 %64, %v60
    %v66 = vpop.permute.xlu0 %65
    %67 = vset.pattern.permute.xlu0 0
    %68 = vperm.xlu0 %67, %v61
    %v69 = vpop.permute.xlu0 %68
    %vm70 = vcmp.eq.s32.totalorder %v63, %v66
    %vm71 = vcmp.eq.s32.totalorder %v63, %v69
    %v72 = vsel %vm70, 1, 0
    %v73 = vsel %vm71, 1, 0
    %v74 = vcvt.s32.f32 %v72
    %v75 = vcvt.s32.f32 %v73
    %v76 = vld [vmem:[#allocation5] sm:$0xf]
    %vm77 = vcmask 31744
    %v79 = vsel %vm77, %v74, 0
    %v82 = vsel %vm77, %v75, 0
    %vm84 = vcmask 1043456
    %v86 = vsel %vm84, %v76, 0
    %88 = vmatprep.subr.mxu0 0.0
    %89 = vmatpush1.msra.mxu0 0.0
    %90 = vmatprep.subr.mxu0 0.0
    %91 = vmatpush1.msra.mxu0 0.0
    %92 = vmatprep.subr.mxu0 0.0
    %93 = vmatpush1.msra.mxu0 0.0
    %94 = vmatprep.subr.mxu0 0.0
    %95 = vmatpush1.msra.mxu0 0.0
    %96 = vmatprep.subr.mxu0 0.0
    %97 = vmatpush1.msra.mxu0 0.0
    %98 = vmatprep.subr.mxu0 0.0
    %99 = vmatpush1.msra.mxu0 0.0
    %100 = vmatprep.subr.mxu0 0.0
    %101 = vmatpush1.msra.mxu0 0.0
    %102 = vmatprep.subr.mxu0 0.0
    %103 = vmatpush1.msra.mxu0 0.0
    %104 = vmatprep.subr.mxu0 0.0
    %105 = vmatpush1.msra.mxu0 0.0
    %106 = vmatprep.subr.mxu0 0.0
    %107 = vmatpush1.msra.mxu0 0.0
    %108 = vmatprep.subr.mxu0 0.0
    %109 = vmatpush1.msra.mxu0 0.0
    %110 = vmatprep.subr.mxu0 0.0
    %111 = vmatpush1.msra.mxu0 0.0
    %112 = vmatprep.subr.mxu0 0.0
    %113 = vmatpush1.msra.mxu0 0.0
    %114 = vmatprep.subr.mxu0 0.0
    %115 = vmatpush1.msra.mxu0 0.0
    %116 = vmatprep.subr.mxu0 0.0
    %117 = vmatpush1.msra.mxu0 0.0
    %118 = vmatprep.subr.mxu0 0.0
    %119 = vmatpush1.msra.mxu0 %v86
    %120 = vmatprep.subr.mxu0 0.0
    %121 = vmatpush2.msra.mxu0 0.0
    %122 = vmatprep.subr.mxu0 0.0
    %123 = vmatpush2.msra.mxu0 0.0
    %124 = vmatprep.subr.mxu0 0.0
    %125 = vmatpush2.msra.mxu0 0.0
    %126 = vmatprep.subr.mxu0 0.0
    %127 = vmatpush2.msra.mxu0 0.0
    %128 = vmatprep.subr.mxu0 0.0
    %129 = vmatpush2.msra.mxu0 0.0
    %130 = vmatprep.subr.mxu0 0.0
    %131 = vmatpush2.msra.mxu0 0.0
    %132 = vmatprep.subr.mxu0 0.0
    %133 = vmatpush2.msra.mxu0 0.0
    %134 = vmatprep.subr.mxu0 0.0
    %135 = vmatpush2.msra.mxu0 0.0
    %136 = vmatprep.subr.mxu0 0.0
    %137 = vmatpush2.msra.mxu0 0.0
    %138 = vmatprep.subr.mxu0 0.0
    %139 = vmatpush2.msra.mxu0 0.0
    %140 = vmatprep.subr.mxu0 0.0
    %141 = vmatpush2.msra.mxu0 0.0
    %142 = vmatprep.subr.mxu0 0.0
    %143 = vmatpush2.msra.mxu0 0.0
    %144 = vmatprep.subr.mxu0 0.0
    %145 = vmatpush2.msra.mxu0 0.0
    %146 = vmatprep.subr.mxu0 0.0
    %147 = vmatpush2.msra.mxu0 0.0
    %148 = vmatprep.subr.mxu0 0.0
    %149 = vmatpush2.msra.mxu0 0.0
    %150 = vmatprep.subr.mxu0 0.0
    %151 = vmatpush2.msra.mxu0 0.0
    %152 = vmatprep.mubr.f32.mxu0 0.0
    %153 = vmatmul.mubr.f32.gmra.mxu0 %v79
    %v154 = vpop.f32.mrf.mxu0
    %v155 = vadd.f32 0.0, %v154
    %v156 = vpop.f32.mrf.mxu0
    %157 = vmatprep.mubr.f32.mxu0 0.0
    %158 = vmatmul.mubr.f32.gmra.mxu0 %v82
    %v159 = vpop.f32.mrf.mxu0
    %v160 = vadd.f32 0.0, %v159
    %v161 = vpop.f32.mrf.mxu0
    %162 = vdwg.mxu0
    %vm163 = vcmask 130048
    %v165 = vsel %vm163, %v56, 0
    %v168 = vsel %vm163, %v57, 0
    %170 = vmatprep.subr.mxu0 0.0
    %171 = vmatpush1.msra.mxu0 0.0
    %172 = vmatprep.subr.mxu0 0.0
    %173 = vmatpush1.msra.mxu0 0.0
    %174 = vmatprep.subr.mxu0 0.0
    %175 = vmatpush1.msra.mxu0 0.0
    %176 = vmatprep.subr.mxu0 0.0
    %177 = vmatpush1.msra.mxu0 0.0
    %178 = vmatprep.subr.mxu0 0.0
    %179 = vmatpush1.msra.mxu0 0.0
    %180 = vmatprep.subr.mxu0 0.0
    %181 = vmatpush1.msra.mxu0 0.0
    %182 = vmatprep.subr.mxu0 0.0
    %183 = vmatpush1.msra.mxu0 0.0
    %184 = vmatprep.subr.mxu0 0.0
    %185 = vmatpush1.msra.mxu0 0.0
    %186 = vmatprep.subr.mxu0 0.0
    %187 = vmatpush1.msra.mxu0 0.0
    %188 = vmatprep.subr.mxu0 0.0
    %189 = vmatpush1.msra.mxu0 0.0
    %190 = vmatprep.subr.mxu0 0.0
    %191 = vmatpush1.msra.mxu0 0.0
    %192 = vmatprep.subr.mxu0 0.0
    %193 = vmatpush1.msra.mxu0 0.0
    %194 = vmatprep.subr.mxu0 0.0
    %195 = vmatpush1.msra.mxu0 0.0
    %196 = vmatprep.subr.mxu0 0.0
    %197 = vmatpush1.msra.mxu0 0.0
    %198 = vmatprep.subr.mxu0 0.0
    %199 = vmatpush1.msra.mxu0 %v59
    %200 = vmatprep.subr.mxu0 0.0
    %201 = vmatpush1.msra.mxu0 %v58
    %202 = vmatprep.subr.mxu0 0.0
    %203 = vmatpush2.msra.mxu0 0.0
    %204 = vmatprep.subr.mxu0 0.0
    %205 = vmatpush2.msra.mxu0 0.0
    %206 = vmatprep.subr.mxu0 0.0
    %207 = vmatpush2.msra.mxu0 0.0
    %208 = vmatprep.subr.mxu0 0.0
    %209 = vmatpush2.msra.mxu0 0.0
    %210 = vmatprep.subr.mxu0 0.0
    %211 = vmatpush2.msra.mxu0 0.0
    %212 = vmatprep.subr.mxu0 0.0
    %213 = vmatpush2.msra.mxu0 0.0
    %214 = vmatprep.subr.mxu0 0.0
    %215 = vmatpush2.msra.mxu0 0.0
    %216 = vmatprep.subr.mxu0 0.0
    %217 = vmatpush2.msra.mxu0 0.0
    %218 = vmatprep.subr.mxu0 0.0
    %219 = vmatpush2.msra.mxu0 0.0
    %220 = vmatprep.subr.mxu0 0.0
    %221 = vmatpush2.msra.mxu0 0.0
    %222 = vmatprep.subr.mxu0 0.0
    %223 = vmatpush2.msra.mxu0 0.0
    %224 = vmatprep.subr.mxu0 0.0
    %225 = vmatpush2.msra.mxu0 0.0
    %226 = vmatprep.subr.mxu0 0.0
    %227 = vmatpush2.msra.mxu0 0.0
    %228 = vmatprep.subr.mxu0 0.0
    %229 = vmatpush2.msra.mxu0 0.0
    %230 = vmatprep.subr.mxu0 0.0
    %231 = vmatpush2.msra.mxu0 0.0
    %232 = vmatprep.subr.mxu0 0.0
    %233 = vmatpush2.msra.mxu0 0.0
    %234 = vmatprep.mubr.f32.mxu0 0.0
    %235 = vmatmul.mubr.f32.gmra.mxu0 %v165
    %v236 = vpop.f32.mrf.mxu0
    %v237 = vadd.f32 %v155, %v236
    %v238 = vpop.f32.mrf.mxu0
    %239 = vmatprep.mubr.f32.mxu0 0.0
    %240 = vmatmul.mubr.f32.gmra.mxu0 %v168
    %v241 = vpop.f32.mrf.mxu0
    %v242 = vadd.f32 %v160, %v241
    %v243 = vpop.f32.mrf.mxu0
    %244 = vdwg.mxu0
    %v245 = vld [vmem:[%s3] sm:$0x1]
    %v247 = vlaneseq
    %v248 = vshrl.u32 %v247, 7
    %v249 = vsub.s32 0, %v248
    %v250 = vrot.slane %v245, %v249
    %v252 = vadd.f32 %v237, %v250
    %v253 = vadd.f32 %v242, %v250
    %v254 = vld [vmem:[%s5] sm:$0x1]
    %v255 = vld [vmem:[%s6] sm:$0x1]
    %256 = vadd.xlane.f32.xlu0 %v252
    %v257 = vpop.xlane.xlu0 %256
    %258 = vadd.xlane.f32.xlu0 %v253
    %v259 = vpop.xlane.xlu0 %258
    %v260 = vmul.f32 %v257, 0.03125
    %v261 = vmul.f32 %v259, 0.03125
    %v262 = vsub.f32 %v252, %v260
    %v263 = vsub.f32 %v253, %v261
    %vm264 = vcmp.lt.s32.totalorder %v63, 32
    %v265 = vsel %vm264, %v262, 0.0
    %v266 = vsel %vm264, %v263, 0.0
    %v267 = vmul.f32 %v265, %v265
    %v268 = vmul.f32 %v266, %v266
    %269 = vadd.xlane.f32.xlu0 %v267
    %v270 = vpop.xlane.xlu0 %269
    %271 = vadd.xlane.f32.xlu0 %v268
    %v272 = vpop.xlane.xlu0 %271
    %v273 = vmul.f32 %v270, 0.03125
    %v274 = vmul.f32 %v272, 0.03125
    %v275 = vadd.f32 %v273, 1e-05
    %v276 = vadd.f32 %v274, 1e-05
    %v277 = vrsqrt.pop %v275
    %v278 = vrsqrt.pop %v276
    %v279 = vmul.f32 %v265, %v277
    %v280 = vmul.f32 %v266, %v278
    %v282 = vlaneseq
    %v283 = vshrl.u32 %v282, 7
    %v284 = vsub.s32 0, %v283
    %v285 = vrot.slane %v254, %v284
    %v287 = vmul.f32 %v279, %v285
    %v288 = vmul.f32 %v280, %v285
    %v290 = vlaneseq
    %v291 = vshrl.u32 %v290, 7
    %v292 = vsub.s32 0, %v291
    %v293 = vrot.slane %v255, %v292
    %v295 = vadd.f32 %v287, %v293
    %v296 = vadd.f32 %v288, %v293
    %v297 = vld [vmem:[%s7] sm:$0xff]
    %v298 = vadd.f32 %v295, %v297
    %v299 = vadd.f32 %v296, %v297
    %300 = vst [vmem:[#allocation7] sm:$0xff] %v298
    %301 = vst [vmem:[#allocation7 + $0x8] sm:$0xff] %v299
    // Predicated region
    $region42: #{tpu_custom_call.1} parent=1 // pred_check
      _
    $region43: #{tpu_custom_call.1} parent=1 // pred_check_branch
      %303 = sbr.rel (0) target = $region45
    $region44: #{tpu_custom_call.1} parent=1 // pred_region
      %s305 = ssub.s32 256, 256
      %306 = vsyncadd [#allocation4], %s305
      %s307 = sshll.u32 [#allocation7], 4
      %s308 = int_to_ptr.vmem [resolvable:$true] %s307
      %313 = dma.vmem_to_hbm [thread:$0]  %s308, 256, %s8, [#allocation4], 128, 128, 8
    $region45: #{tpu_custom_call.1} parent=1 // pred_fallthru
      _
    // Predicated region
    $region46: #{tpu_custom_call.1} parent=1 // pred_check
      _
    $region47: #{tpu_custom_call.1} parent=1 // pred_check_branch
      %315 = sbr.rel (0) target = $region49
    $region48: #{tpu_custom_call.1} parent=1 // pred_region
      %316 = dma.done [#allocation4], 256
    $region49: #{tpu_custom_call.1} parent=1 // pred_fallthru
      _
    %317 = vsyncpa [#allocation3], 1
    %318 = vsyncpa [#allocation6], 1
    %319 = vsyncpa [#allocation4], 1

</llo_original>
